<compile_context>
chip_gen: v7x
topology: tpu7x:2x2x1
jax: 0.10.0
libtpu: 0.0.40
codegen_flags: <defaults>
</compile_context>

<pallas_src>
import jax
import jax.numpy as jnp
from jax import lax
from jax.experimental import pallas as pl
from jax.experimental.pallas import tpu as pltpu


def _mlp_kernel(x_ref, w1_ref, b1_ref, w2_ref, b2_ref, w3t_ref, b3_ref, o_ref):
    # Layer 1: [TILE_B, D](bf16) @ [D, 32](bf16) -> f32, + bias, ReLU
    h1 = jnp.dot(x_ref[...], w1_ref[...], preferred_element_type=jnp.float32)
    h1 = jnp.maximum(h1 + b1_ref[...], 0.0)
    # dropout1: identity in eval mode

    # Layer 2: [TILE_B, 32] @ [32, 16] -> f32, + bias, ReLU
    h2 = jnp.dot(h1.astype(jnp.bfloat16), w2_ref[...],
                 preferred_element_type=jnp.float32)
    h2 = jnp.maximum(h2 + b2_ref[...], 0.0)
    # dropout2: identity in eval mode

    # Layer 3 computed transposed so the result is lane-dense:
    # [1, 16] . [TILE_B, 16]^T -> [1, TILE_B]
    h3 = lax.dot_general(
        w3t_ref[...], h2.astype(jnp.bfloat16),
        dimension_numbers=(((1,), (1,)), ((), ())),
        preferred_element_type=jnp.float32)
    h3 = h3 + b3_ref[...]                     # b3 is (1, 1), broadcasts over lanes

    # Sigmoid: exp on EUP, approximate reciprocal on EUP (free slot) instead of VALU div.
    e = jnp.exp(-h3)
    o_ref[...] = pl.reciprocal(1.0 + e, approx=True).astype(o_ref.dtype)


def _round_up(n, m):
    return (n + m - 1) // m * m


_TILE_B_MAX = 1024  # bf16 x tile (1024 x D) double-buffered stays far under even
                    # v5e's 16 MiB scoped VMEM for any reasonable D.


def binary_classifier_forward(x, params):
    """x: [B, input_dim] float32. Returns [B, 1] float32 (sigmoid probabilities)."""
    w1, b1, w2, b2, w3, b3 = params
    B, D = x.shape

    # Tile size: large (multiple of 128 -> lane-dense output blocks) when B is big,
    # otherwise a single full-array block padded to a sublane multiple.
    if B >= _TILE_B_MAX:
        tile_b = _TILE_B_MAX
    else:
        tile_b = _round_up(B, 8)
    b_pad = _round_up(B, tile_b)
    if b_pad != B:
        x = jnp.pad(x, ((0, b_pad - B), (0, 0)))

    # Stream activations/weights in bf16; keep biases (elementwise math) in f32.
    x_bf = x.astype(jnp.bfloat16)
    w1_bf = w1.astype(jnp.bfloat16)
    w2_bf = w2.astype(jnp.bfloat16)
    w3t_bf = w3.T.astype(jnp.bfloat16)        # [1, 16] for the transposed layer 3

    grid = (b_pad // tile_b,)
    const = lambda a: pl.BlockSpec(a.shape, lambda i: (0,) * a.ndim)

    cost = pl.CostEstimate(
        flops=2 * b_pad * (D * 32 + 32 * 16 + 16),
        transcendentals=2 * b_pad,
        bytes_accessed=(b_pad * D * 2 + b_pad * 4
                        + (w1.size + w2.size + w3.size) * 2
                        + (b1.size + b2.size + b3.size) * 4),
    )

    out = pl.pallas_call(
        _mlp_kernel,
        out_shape=jax.ShapeDtypeStruct((1, b_pad), jnp.float32),
        grid=grid,
        in_specs=[
            pl.BlockSpec((tile_b, D), lambda i: (i, 0)),   # x: tiled over batch
            const(w1_bf), const(b1),                        # weights/biases: resident
            const(w2_bf), const(b2),
            const(w3t_bf), const(b3),
        ],
        out_specs=pl.BlockSpec((1, tile_b), lambda i: (0, i)),  # lane-dense output
        compiler_params=pltpu.CompilerParams(
            dimension_semantics=("parallel",)),
        cost_estimate=cost,
    )(x_bf, w1_bf, b1, w2_bf, b2, w3t_bf, b3)

    return out[0, :B].reshape(B, 1)


def init_params(key, input_dim):
    """Deterministic init mimicking nn.Linear default (uniform +/- 1/sqrt(fan_in)).
    Weights stored as [in, out]."""
    dims = [(input_dim, 32), (32, 16), (16, 1)]
    params = []
    for fan_in, fan_out in dims:
        kw, kb, key = jax.random.split(key, 3)
        bound = 1.0 / jnp.sqrt(jnp.float32(fan_in))
        w = jax.random.uniform(kw, (fan_in, fan_out), jnp.float32, -bound, bound)
        b = jax.random.uniform(kb, (1, fan_out), jnp.float32, -bound, bound)
        params.extend([w, b])
    return tuple(params)


def reference_forward(x, params):
    w1, b1, w2, b2, w3, b3 = params
    h = jnp.maximum(x @ w1 + b1, 0.0)
    h = jnp.maximum(h @ w2 + b2, 0.0)
    return jax.nn.sigmoid(h @ w3 + b3)


if __name__ == "__main__":
    key = jax.random.PRNGKey(0)
    kx, kp, kx2 = jax.random.split(key, 3)

    # Small demo shapes (single grid step, full-array blocks).
    input_dim = 16
    batch = 8
    x = jax.random.normal(kx, (batch, input_dim), jnp.float32)
    params = init_params(kp, input_dim)

    out = jax.block_until_ready(binary_classifier_forward(x, params))
    ref = reference_forward(x, params)
    assert out.shape == (batch, 1)
    assert jnp.allclose(out, ref, atol=2e-2, rtol=2e-2), "mismatch vs reference (small)"

    # Exercise the tiled path (grid > 1, lane-dense 128-multiple output blocks).
    batch2, dim2 = 2048, 64
    x2 = jax.random.normal(kx2, (batch2, dim2), jnp.float32)
    params2 = init_params(kp, dim2)
    out2 = jax.block_until_ready(binary_classifier_forward(x2, params2))
    ref2 = reference_forward(x2, params2)
    assert out2.shape == (batch2, 1)
    assert jnp.allclose(out2, ref2, atol=2e-2, rtol=2e-2), "mismatch vs reference (tiled)"

    print("KERNEL_OK")
</pallas_src>

<mosaic_0001>
module attributes {stable_mosaic.version = 11 : i64} {
  func.func @_mlp_kernel(%arg0: i32, %arg1: memref<8x16xbf16, #tpu.memory_space<vmem>>, %arg2: memref<16x32xbf16, #tpu.memory_space<vmem>>, %arg3: memref<1x32xf32, #tpu.memory_space<vmem>>, %arg4: memref<32x16xbf16, #tpu.memory_space<vmem>>, %arg5: memref<1x16xf32, #tpu.memory_space<vmem>>, %arg6: memref<1x16xbf16, #tpu.memory_space<vmem>>, %arg7: memref<1x1xf32, #tpu.memory_space<vmem>>, %arg8: memref<1x8xf32, #tpu.memory_space<vmem>>) attributes {dimension_semantics = [#tpu.dimension_semantics<parallel>], iteration_bounds = array<i64: 1>, scalar_prefetch = 0 : i64, scratch_operands = 0 : i64, tpu.core_type = #tpu.core_type<tc>, window_params = [{transform_indices = @transform_0, window_bounds = array<i64: 8, 16>}, {pipeline_mode = #tpu.pipeline_mode<synchronous>, transform_indices = @transform_1, window_bounds = array<i64: 16, 32>}, {pipeline_mode = #tpu.pipeline_mode<synchronous>, transform_indices = @transform_2, window_bounds = array<i64: 1, 32>}, {pipeline_mode = #tpu.pipeline_mode<synchronous>, transform_indices = @transform_3, window_bounds = array<i64: 32, 16>}, {pipeline_mode = #tpu.pipeline_mode<synchronous>, transform_indices = @transform_4, window_bounds = array<i64: 1, 16>}, {pipeline_mode = #tpu.pipeline_mode<synchronous>, transform_indices = @transform_5, window_bounds = array<i64: 1, 16>}, {pipeline_mode = #tpu.pipeline_mode<synchronous>, transform_indices = @transform_6, window_bounds = array<i64: 1, 1>}, {transform_indices = @transform_7, window_bounds = array<i64: 1, 8>}]} {
    %c0 = arith.constant 0 : index
    %c0_0 = arith.constant 0 : index
    %0 = vector.load %arg1[%c0, %c0_0] : memref<8x16xbf16, #tpu.memory_space<vmem>>, vector<8x16xbf16>
    %c0_1 = arith.constant 0 : index
    %c0_2 = arith.constant 0 : index
    %1 = vector.load %arg2[%c0_1, %c0_2] : memref<16x32xbf16, #tpu.memory_space<vmem>>, vector<16x32xbf16>
    %cst = arith.constant dense<0.000000e+00> : vector<8x32xf32>
    %2 = tpu.matmul %0, %1, %cst {dimension_numbers = #tpu.dot_dimension_numbers<[1], [0], [0], [1], [0, 0, 1, 1], [], []>} : vector<8x16xbf16>, vector<16x32xbf16>, vector<8x32xf32> -> vector<8x32xf32>
    %c0_3 = arith.constant 0 : index
    %c0_4 = arith.constant 0 : index
    %3 = vector.load %arg3[%c0_3, %c0_4] : memref<1x32xf32, #tpu.memory_space<vmem>>, vector<1x32xf32>
    %4 = vector.broadcast %3 : vector<1x32xf32> to vector<8x32xf32>
    %5 = arith.addf %2, %4 : vector<8x32xf32>
    %cst_5 = arith.constant 0.000000e+00 : f32
    %6 = vector.broadcast %cst_5 : f32 to vector<8x32xf32>
    %7 = arith.maximumf %5, %6 : vector<8x32xf32>
    %8 = arith.truncf %7 : vector<8x32xf32> to vector<8x32xbf16>
    %c0_6 = arith.constant 0 : index
    %c0_7 = arith.constant 0 : index
    %9 = vector.load %arg4[%c0_6, %c0_7] : memref<32x16xbf16, #tpu.memory_space<vmem>>, vector<32x16xbf16>
    %cst_8 = arith.constant dense<0.000000e+00> : vector<8x16xf32>
    %10 = tpu.matmul %8, %9, %cst_8 {dimension_numbers = #tpu.dot_dimension_numbers<[1], [0], [0], [1], [0, 0, 1, 1], [], []>} : vector<8x32xbf16>, vector<32x16xbf16>, vector<8x16xf32> -> vector<8x16xf32>
    %c0_9 = arith.constant 0 : index
    %c0_10 = arith.constant 0 : index
    %11 = vector.load %arg5[%c0_9, %c0_10] : memref<1x16xf32, #tpu.memory_space<vmem>>, vector<1x16xf32>
    %12 = vector.broadcast %11 : vector<1x16xf32> to vector<8x16xf32>
    %13 = arith.addf %10, %12 : vector<8x16xf32>
    %cst_11 = arith.constant 0.000000e+00 : f32
    %14 = vector.broadcast %cst_11 : f32 to vector<8x16xf32>
    %15 = arith.maximumf %13, %14 : vector<8x16xf32>
    %c0_12 = arith.constant 0 : index
    %c0_13 = arith.constant 0 : index
    %16 = vector.load %arg6[%c0_12, %c0_13] : memref<1x16xbf16, #tpu.memory_space<vmem>>, vector<1x16xbf16>
    %17 = arith.truncf %15 : vector<8x16xf32> to vector<8x16xbf16>
    %cst_14 = arith.constant dense<0.000000e+00> : vector<1x8xf32>
    %18 = tpu.matmul %16, %17, %cst_14 {dimension_numbers = #tpu.dot_dimension_numbers<[1], [1], [0], [0], [0, 0, 1, 0], [], []>} : vector<1x16xbf16>, vector<8x16xbf16>, vector<1x8xf32> -> vector<1x8xf32>
    %c0_15 = arith.constant 0 : index
    %c0_16 = arith.constant 0 : index
    %19 = vector.load %arg7[%c0_15, %c0_16] : memref<1x1xf32, #tpu.memory_space<vmem>>, vector<1x1xf32>
    %20 = vector.broadcast %19 : vector<1x1xf32> to vector<1x8xf32>
    %21 = arith.addf %18, %20 : vector<1x8xf32>
    %cst_17 = arith.constant 0.000000e+00 : f32
    %22 = vector.broadcast %cst_17 : f32 to vector<1x8xf32>
    %23 = arith.subf %22, %21 : vector<1x8xf32>
    %24 = math.exp %23 : vector<1x8xf32>
    %cst_18 = arith.constant 1.000000e+00 : f32
    %25 = vector.broadcast %cst_18 : f32 to vector<1x8xf32>
    %26 = arith.addf %25, %24 : vector<1x8xf32>
    %27 = tpu.reciprocal %26 {approx = true} : vector<1x8xf32> -> vector<1x8xf32>
    %c0_19 = arith.constant 0 : index
    %c0_20 = arith.constant 0 : index
    %28 = vector.load %arg8[%c0_19, %c0_20] : memref<1x8xf32, #tpu.memory_space<vmem>>, vector<1x8xf32>
    tpu.vector_store %arg8[%c0_19, %c0_20], %27 {strides = array<i32>} : memref<1x8xf32, #tpu.memory_space<vmem>>, vector<1x8xf32>,
    return
  }
  func.func @transform_0(%arg0: i32) -> (i32, i32) {
    %c0_i32 = arith.constant 0 : i32
    %c0_i32_0 = arith.constant 0 : i32
    return %arg0, %c0_i32 : i32, i32
  }
  func.func @transform_1(%arg0: i32) -> (i32, i32) {
    %c0_i32 = arith.constant 0 : i32
    %c0_i32_0 = arith.constant 0 : i32
    %c0_i32_1 = arith.constant 0 : i32
    return %c0_i32, %c0_i32_0 : i32, i32
  }
  func.func @transform_2(%arg0: i32) -> (i32, i32) {
    %c0_i32 = arith.constant 0 : i32
    %c0_i32_0 = arith.constant 0 : i32
    %c0_i32_1 = arith.constant 0 : i32
    return %c0_i32, %c0_i32_0 : i32, i32
  }
  func.func @transform_3(%arg0: i32) -> (i32, i32) {
    %c0_i32 = arith.constant 0 : i32
    %c0_i32_0 = arith.constant 0 : i32
    %c0_i32_1 = arith.constant 0 : i32
    return %c0_i32, %c0_i32_0 : i32, i32
  }
  func.func @transform_4(%arg0: i32) -> (i32, i32) {
    %c0_i32 = arith.constant 0 : i32
    %c0_i32_0 = arith.constant 0 : i32
    %c0_i32_1 = arith.constant 0 : i32
    return %c0_i32, %c0_i32_0 : i32, i32
  }
  func.func @transform_5(%arg0: i32) -> (i32, i32) {
    %c0_i32 = arith.constant 0 : i32
    %c0_i32_0 = arith.constant 0 : i32
    %c0_i32_1 = arith.constant 0 : i32
    return %c0_i32, %c0_i32_0 : i32, i32
  }
  func.func @transform_6(%arg0: i32) -> (i32, i32) {
    %c0_i32 = arith.constant 0 : i32
    %c0_i32_0 = arith.constant 0 : i32
    %c0_i32_1 = arith.constant 0 : i32
    return %c0_i32, %c0_i32_0 : i32, i32
  }
  func.func @transform_7(%arg0: i32) -> (i32, i32) {
    %c0_i32 = arith.constant 0 : i32
    %c0_i32_0 = arith.constant 0 : i32
    return %c0_i32, %arg0 : i32, i32
  }
}

</mosaic_0001>

<llo_original>
// kernel: tpu_custom_call.1
$region0: #{tpu_custom_call.1}
  #allocation0 [shape = 'u32[]', space=smem, size = 0x4, offset = 0x4, fixed_abs, tag = 'smem constant byte address 0x4 - core index']
  #allocation1 [shape = 'u32[144,128]{1,0:T(1,128)}', space=vmem, size = 0x12000, scoped, tag = 'internal scratch']
  #allocation2 [shape = 'f32[1,1]{1,0:T(1,128)S(1)}', space=vmem, size = 0x200, scoped, tag = 'scoped memory for tpu_custom_call.1']
  %s0 = inlined_call_operand.vmem [shape: bf16[8,16], index: 0, kind: input, shape index: {}]
  %s1 = inlined_call_operand.vmem [shape: bf16[16,32], index: 1, kind: input, shape index: {}]
  %s2 = inlined_call_operand.vmem [shape: f32[1,32], index: 2, kind: input, shape index: {}]
  %s3 = inlined_call_operand.vmem [shape: bf16[32,16], index: 3, kind: input, shape index: {}]
  %s4 = inlined_call_operand.vmem [shape: f32[1,16], index: 4, kind: input, shape index: {}]
  %s5 = inlined_call_operand.vmem [shape: bf16[1,16], index: 5, kind: input, shape index: {}]
  %s6 = inlined_call_operand.<no memory space> [shape: f32[1,1], index: 6, kind: input, shape index: {}]
  %s7 = inlined_call_operand.hbm [shape: f32[1,8], index: 7, kind: output, shape index: {}]
  %s8 = sld [smem:[#allocation0]]
  $region38: #{tpu_custom_call.1} parent=0
    _
  %s10 = ssub.s32 1, %s8
  %s11 = scalar_select 0, %s10, %s8
  %v12 = vstv %s6
  %13 = vst [vmem:[#allocation2] sm:$0x1] %v12
  $region1: #{tpu_custom_call.1} parent=0
    #allocation3 [shape = 'u8[512]{0}', space=vmem, size = 0x400, scoped, tag = 'output window, operand 0, single buffered']
    #allocation4 [shape = 's32[1]{0}', space=sflag, size = 0x4, scoped, tag = 'scoped memory for tpu_custom_call.1']
    %14 = vsyncpa [#allocation4], 0
    // Predicated region
    $region2: #{tpu_custom_call.1} parent=1 // pred_check
      _
    $region3: #{tpu_custom_call.1} parent=1 // pred_check_branch
      %16 = sbr.rel (0) target = $region5
    $region4: #{tpu_custom_call.1} parent=1 // pred_region
      _
    $region5: #{tpu_custom_call.1} parent=1 // pred_fallthru
      _
    // Predicated region
    $region6: #{tpu_custom_call.1} parent=1 // pred_check
      _
    $region7: #{tpu_custom_call.1} parent=1 // pred_check_branch
      %18 = sbr.rel (0) target = $region9
    $region8: #{tpu_custom_call.1} parent=1 // pred_region
      _
    $region9: #{tpu_custom_call.1} parent=1 // pred_fallthru
      _
    // Predicated region
    $region10: #{tpu_custom_call.1} parent=1 // pred_check
      _
    $region11: #{tpu_custom_call.1} parent=1 // pred_check_branch
      %20 = sbr.rel (0) target = $region13
    $region12: #{tpu_custom_call.1} parent=1 // pred_region
      _
    $region13: #{tpu_custom_call.1} parent=1 // pred_fallthru
      _
    // Predicated region
    $region14: #{tpu_custom_call.1} parent=1 // pred_check
      _
    $region15: #{tpu_custom_call.1} parent=1 // pred_check_branch
      %22 = sbr.rel (0) target = $region17
    $region16: #{tpu_custom_call.1} parent=1 // pred_region
      _
    $region17: #{tpu_custom_call.1} parent=1 // pred_fallthru
      _
    // Predicated region
    $region18: #{tpu_custom_call.1} parent=1 // pred_check
      _
    $region19: #{tpu_custom_call.1} parent=1 // pred_check_branch
      %24 = sbr.rel (0) target = $region21
    $region20: #{tpu_custom_call.1} parent=1 // pred_region
      _
    $region21: #{tpu_custom_call.1} parent=1 // pred_fallthru
      _
    // Predicated region
    $region22: #{tpu_custom_call.1} parent=1 // pred_check
      _
    $region23: #{tpu_custom_call.1} parent=1 // pred_check_branch
      %26 = sbr.rel (0) target = $region25
    $region24: #{tpu_custom_call.1} parent=1 // pred_region
      _
    $region25: #{tpu_custom_call.1} parent=1 // pred_fallthru
      _
    // Predicated region
    $region26: #{tpu_custom_call.1} parent=1 // pred_check
      _
    $region27: #{tpu_custom_call.1} parent=1 // pred_check_branch
      %28 = sbr.rel (0) target = $region29
    $region28: #{tpu_custom_call.1} parent=1 // pred_region
      _
    $region29: #{tpu_custom_call.1} parent=1 // pred_fallthru
      _
    %v30 = vld [vmem:[%s0] sm:$0xf]
    %v31 = vld [vmem:[%s1] sm:$0xf]
    %v32 = vld [vmem:[%s1 + $0x4] sm:$0xf]
    %v33 = vld [vmem:[%s2] sm:$0x1]
    %v35 = vlaneseq
    %v36 = vshrl.u32 %v35, 7
    %v37 = vsub.s32 0, %v36
    %v38 = vrot.slane %v33, %v37
    %v42 = vunpack.c.l.b16 %v31
    %v43 = vunpack.c.l.b16 %v32
    %v44 = vpack.c.b16 %v43, %v42
    %vm46 = vcmask 130048
    %v48 = vsel %vm46, %v30, 0
    %50 = vmatprep.subr.bf16.mxu0 0
    %51 = vmatpush1.bf16.msra.mxu0 %v44
    %52 = vmatprep.subr.bf16.mxu0 0
    %53 = vmatpush1.bf16.msra.mxu0 0
    %54 = vmatprep.subr.bf16.mxu0 0
    %55 = vmatpush1.bf16.msra.mxu0 0
    %56 = vmatprep.subr.bf16.mxu0 0
    %57 = vmatpush1.bf16.msra.mxu0 0
    %58 = vmatprep.subr.bf16.mxu0 0
    %59 = vmatpush1.bf16.msra.mxu0 0
    %60 = vmatprep.subr.bf16.mxu0 0
    %61 = vmatpush1.bf16.msra.mxu0 0
    %62 = vmatprep.subr.bf16.mxu0 0
    %63 = vmatpush1.bf16.msra.mxu0 0
    %64 = vmatprep.subr.bf16.mxu0 0
    %65 = vmatpush1.bf16.msra.mxu0 0
    %66 = vmatprep.subr.bf16.mxu0 0
    %67 = vmatpush1.bf16.msra.mxu0 0
    %68 = vmatprep.subr.bf16.mxu0 0
    %69 = vmatpush1.bf16.msra.mxu0 0
    %70 = vmatprep.subr.bf16.mxu0 0
    %71 = vmatpush1.bf16.msra.mxu0 0
    %72 = vmatprep.subr.bf16.mxu0 0
    %73 = vmatpush1.bf16.msra.mxu0 0
    %74 = vmatprep.subr.bf16.mxu0 0
    %75 = vmatpush1.bf16.msra.mxu0 0
    %76 = vmatprep.subr.bf16.mxu0 0
    %77 = vmatpush1.bf16.msra.mxu0 0
    %78 = vmatprep.subr.bf16.mxu0 0
    %79 = vmatpush1.bf16.msra.mxu0 0
    %80 = vmatprep.subr.bf16.mxu0 0
    %81 = vmatpush1.bf16.msra.mxu0 0
    %82 = vmatprep.mubr.bf16.mxu0 0
    %83 = vmatmul.mubr.bf16.gmra.mrb[0].mxu0 %v48
    %v84 = vpop.f32.mrb[0].mxu0
    %v85 = vadd.f32 %v38, %v84
    %v86 = vpop.f32.mrb[0].mxu0
    %v87 = vpop.f32.mrb[0].mxu0
    %v88 = vpop.f32.mrb[0].mxu0
    %89 = vdwg.mxu0
    %v90 = vmax.f32 %v85, 0.0
    %v91 = vpack.c.bf16 %v90, %v90
    %v92 = vld [vmem:[%s3] sm:$0xf]
    %v93 = vld [vmem:[%s3 + $0x4] sm:$0xf]
    %v94 = vld [vmem:[%s3 + $0x8] sm:$0xf]
    %v95 = vld [vmem:[%s3 + $0xc] sm:$0xf]
    %v96 = vld [vmem:[%s4] sm:$0x1]
    %v98 = vlaneseq
    %v99 = vshrl.u32 %v98, 7
    %v100 = vsub.s32 0, %v99
    %v101 = vrot.slane %v96, %v100
    %v107 = vunpack.c.l.b16 %v92
    %v108 = vunpack.c.l.b16 %v93
    %v109 = vunpack.c.l.b16 %v94
    %v110 = vunpack.c.l.b16 %v95
    %v111 = vpack.c.b16 %v108, %v107
    %v112 = vpack.c.b16 %v110, %v109
    %vm115 = vcmask 261120
    %v117 = vsel %vm115, %v91, 0
    %119 = vmatprep.subr.bf16.mxu0 0
    %120 = vmatpush1.bf16.msra.mxu0 %v111
    %121 = vmatprep.subr.bf16.mxu0 0
    %122 = vmatpush1.bf16.msra.mxu0 %v112
    %123 = vmatprep.subr.bf16.mxu0 0
    %124 = vmatpush1.bf16.msra.mxu0 0
    %125 = vmatprep.subr.bf16.mxu0 0
    %126 = vmatpush1.bf16.msra.mxu0 0
    %127 = vmatprep.subr.bf16.mxu0 0
    %128 = vmatpush1.bf16.msra.mxu0 0
    %129 = vmatprep.subr.bf16.mxu0 0
    %130 = vmatpush1.bf16.msra.mxu0 0
    %131 = vmatprep.subr.bf16.mxu0 0
    %132 = vmatpush1.bf16.msra.mxu0 0
    %133 = vmatprep.subr.bf16.mxu0 0
    %134 = vmatpush1.bf16.msra.mxu0 0
    %135 = vmatprep.subr.bf16.mxu0 0
    %136 = vmatpush1.bf16.msra.mxu0 0
    %137 = vmatprep.subr.bf16.mxu0 0
    %138 = vmatpush1.bf16.msra.mxu0 0
    %139 = vmatprep.subr.bf16.mxu0 0
    %140 = vmatpush1.bf16.msra.mxu0 0
    %141 = vmatprep.subr.bf16.mxu0 0
    %142 = vmatpush1.bf16.msra.mxu0 0
    %143 = vmatprep.subr.bf16.mxu0 0
    %144 = vmatpush1.bf16.msra.mxu0 0
    %145 = vmatprep.subr.bf16.mxu0 0
    %146 = vmatpush1.bf16.msra.mxu0 0
    %147 = vmatprep.subr.bf16.mxu0 0
    %148 = vmatpush1.bf16.msra.mxu0 0
    %149 = vmatprep.subr.bf16.mxu0 0
    %150 = vmatpush1.bf16.msra.mxu0 0
    %151 = vmatprep.mubr.bf16.mxu0 0
    %152 = vmatmul.mubr.bf16.gmra.mrb[0].mxu0 %v117
    %v153 = vpop.f32.mrb[0].mxu0
    %v154 = vadd.f32 %v101, %v153
    %v155 = vpop.f32.mrb[0].mxu0
    %v156 = vpop.f32.mrb[0].mxu0
    %v157 = vpop.f32.mrb[0].mxu0
    %158 = vdwg.mxu0
    %v159 = vmax.f32 %v154, 0.0
    %v160 = vld [vmem:[%s5] sm:$0x1]
    %v161 = vpack.c.bf16 %v159, %v159
    %v162 = vld [vmem:[#allocation2] sm:$0x1]
    %164 = vset.pattern.permute.xlu0 0
    %165 = vperm.xlu0 %164, %v162
    %v166 = vpop.permute.xlu0 %165
    %v168 = vlaneseq
    %v169 = vshrl.u32 %v168, 7
    %v170 = vsub.s32 0, %v169
    %v171 = vrot.slane %v166, %v170
    %v173 = vsel %vm46, %v160, 0
    %v176 = vsel %vm46, %v161, 0
    %178 = vmatprep.subr.bf16.mxu0 0
    %179 = vmatpush1.bf16.xpose.msra.mxu0 %v176
    %180 = vmatprep.subr.bf16.mxu0 0
    %181 = vmatpush1.bf16.xpose.msra.mxu0 0
    %182 = vmatprep.subr.bf16.mxu0 0
    %183 = vmatpush1.bf16.xpose.msra.mxu0 0
    %184 = vmatprep.subr.bf16.mxu0 0
    %185 = vmatpush1.bf16.xpose.msra.mxu0 0
    %186 = vmatprep.subr.bf16.mxu0 0
    %187 = vmatpush1.bf16.xpose.msra.mxu0 0
    %188 = vmatprep.subr.bf16.mxu0 0
    %189 = vmatpush1.bf16.xpose.msra.mxu0 0
    %190 = vmatprep.subr.bf16.mxu0 0
    %191 = vmatpush1.bf16.xpose.msra.mxu0 0
    %192 = vmatprep.subr.bf16.mxu0 0
    %193 = vmatpush1.bf16.xpose.msra.mxu0 0
    %194 = vmatprep.subr.bf16.mxu0 0
    %195 = vmatpush1.bf16.xpose.msra.mxu0 0
    %196 = vmatprep.subr.bf16.mxu0 0
    %197 = vmatpush1.bf16.xpose.msra.mxu0 0
    %198 = vmatprep.subr.bf16.mxu0 0
    %199 = vmatpush1.bf16.xpose.msra.mxu0 0
    %200 = vmatprep.subr.bf16.mxu0 0
    %201 = vmatpush1.bf16.xpose.msra.mxu0 0
    %202 = vmatprep.subr.bf16.mxu0 0
    %203 = vmatpush1.bf16.xpose.msra.mxu0 0
    %204 = vmatprep.subr.bf16.mxu0 0
    %205 = vmatpush1.bf16.xpose.msra.mxu0 0
    %206 = vmatprep.subr.bf16.mxu0 0
    %207 = vmatpush1.bf16.xpose.msra.mxu0 0
    %208 = vmatprep.subr.bf16.mxu0 0
    %209 = vmatpush1.bf16.xpose.msra.mxu0 0
    %210 = vmatprep.mubr.bf16.mxu0 0
    %211 = vmatmul.mubr.bf16.gmra.mrb[0].mxu0 %v173
    %v212 = vpop.f32.mrb[0].mxu0
    %v213 = vadd.f32 %v171, %v212
    %v214 = vpop.f32.mrb[0].mxu0
    %v215 = vpop.f32.mrb[0].mxu0
    %v216 = vpop.f32.mrb[0].mxu0
    %217 = vdwg.mxu0
    %v218 = vsub.f32 0.0, %v213
    %v219 = vmul.f32 %v218, 1.442695
    %v220 = vpow.pop %v219
    %v221 = vadd.f32 %v220, 1.0
    %v222 = vrcp.pop %v221
    %vm223 = vcmask 57344
    %224 = vst.msk [vmem:[#allocation3] sm:$0x1] %vm223, %v222
    // Predicated region
    $region30: #{tpu_custom_call.1} parent=1 // pred_check
      _
    $region31: #{tpu_custom_call.1} parent=1 // pred_check_branch
      %226 = sbr.rel (0) target = $region33
    $region32: #{tpu_custom_call.1} parent=1 // pred_region
      %s228 = ssub.s32 16, 16
      %229 = vsyncadd [#allocation4], %s228
      %s231 = sshll.u32 [#allocation3], 4
      %s232 = int_to_ptr.vmem [resolvable:$true] %s231
      %234 = dma.vmem_to_hbm [thread:$0]  %s232, 16, %s7, [#allocation4]
    $region33: #{tpu_custom_call.1} parent=1 // pred_fallthru
      _
    // Predicated region
    $region34: #{tpu_custom_call.1} parent=1 // pred_check
      _
    $region35: #{tpu_custom_call.1} parent=1 // pred_check_branch
      %236 = sbr.rel (0) target = $region37
    $region36: #{tpu_custom_call.1} parent=1 // pred_region
      %237 = dma.done [#allocation4], 16
    $region37: #{tpu_custom_call.1} parent=1 // pred_fallthru
      _
    %238 = vsyncpa [#allocation4], 1

</llo_original>
